<compile_context>
chip_gen: v5e
topology: v5e:2x2
jax: 0.10.0
libtpu: 0.0.40
codegen_flags: <defaults>
</compile_context>

<pallas_src>
import numpy as np
import jax
import jax.numpy as jnp
from jax.experimental import pallas as pl
from jax.experimental.pallas import tpu as pltpu

D = 3            # input_dim
L = 3            # n_flow_layer


def planar_flows_kernel(w_ref, uh_ref, b_ref, x_ref, o_ref):
    # x_ref / o_ref: (D, tile_r, 128) sublane/lane-dense tile of points.
    # w_ref, uh_ref: (L*D,) f32 in SMEM ; b_ref: (L,) f32 in SMEM.
    z0 = x_ref[0].astype(jnp.float32)        # (tile_r, 128)
    z1 = x_ref[1].astype(jnp.float32)
    z2 = x_ref[2].astype(jnp.float32)
    for l in range(L):                       # static unrolled loop over flow layers
        w0 = w_ref[l * D + 0]
        w1 = w_ref[l * D + 1]
        w2 = w_ref[l * D + 2]
        u0 = uh_ref[l * D + 0]
        u1 = uh_ref[l * D + 1]
        u2 = uh_ref[l * D + 2]
        b = b_ref[l]
        # lin = w . z + b  as pure elementwise FMAs (no cross-lane reduce, no MXU);
        # tanh goes to the EUP.
        t = jnp.tanh(w0 * z0 + w1 * z1 + w2 * z2 + b)    # (tile_r, 128)
        z0 = z0 + u0 * t
        z1 = z1 + u1 * t
        z2 = z2 + u2 * t
    o_ref[0] = z0.astype(o_ref.dtype)
    o_ref[1] = z1.astype(o_ref.dtype)
    o_ref[2] = z2.astype(o_ref.dtype)


def _precompute_u_hat(w_stack, u_stack):
    """u_hat is data-independent: compute once in XLA, not per grid tile.

    Uses jax.nn.softplus (numerically safe).  Division by sum(w**2) is kept without
    an epsilon for parity with the PyTorch/normflows reference (NaN/inf if w == 0).
    """
    inner = jnp.sum(w_stack * u_stack, axis=1, keepdims=True)   # (L, 1)
    wsq = jnp.sum(w_stack * w_stack, axis=1, keepdims=True)     # (L, 1)
    return u_stack + (jax.nn.softplus(inner) - 1.0 - inner) * w_stack / wsq


def flow_structure_forward(x, w_stack, u_stack, b_stack, *, tile_r=2048):
    """x: (N, D) points. Returns (N, D), matching Flow_structure.forward.

    tile_r = rows of 128 points per grid step (tile_r % 8 == 0).  Default 2048 rows
    (256K points, 3 MiB/block, ~12 MiB double-buffered in+out) fits the default
    32 MiB scoped VMEM everywhere.  v6e can push to ~8192 rows (~1M points); keep
    <= ~4096 rows on v7x's 64 MiB VMEM.
    """
    N, d = x.shape
    assert d == D
    assert tile_r % 8 == 0

    # One-time parameter preprocessing (XLA side).
    u_hat = _precompute_u_hat(w_stack.astype(jnp.float32), u_stack.astype(jnp.float32))
    w_flat = w_stack.astype(jnp.float32).reshape(-1)     # (L*D,)
    uh_flat = u_hat.reshape(-1)                          # (L*D,)
    b_flat = b_stack.astype(jnp.float32).reshape(-1)     # (L,)

    # Lane/sublane-dense layout: (D, R, 128), points split across rows of 128 lanes.
    n_rows = (N + 127) // 128
    n_pad = n_rows * 128
    if n_pad != N:
        # Pad only to the next multiple of 128 (needed for the free reshape below);
        # XLA fuses this with the transpose copy.  Tile-boundary handling is done by
        # Pallas masking of the partial boundary block, not by padding.
        x = jnp.pad(x, ((0, n_pad - N), (0, 0)))
    xt = x.T.reshape(D, n_rows, 128)   # transpose is the one layout copy; reshape is free
    # TODO(synk): callers that can keep points in this (D, R, 128) layout end-to-end
    # should call the pallas_call below directly and skip the boundary transposes.

    # Shrink the tile for small inputs so the grid has >= 2 steps when the data allows
    # (keeps both v7x TensorCores busy) while never exceeding the data.
    half = (n_rows + 1) // 2
    tile_r = max(8, min(tile_r, ((half + 7) // 8) * 8))
    grid = (pl.cdiv(n_rows, tile_r),)

    # Raise the scoped-VMEM limit only if the requested tile needs it.
    blk_bytes = D * tile_r * 128 * jnp.dtype(x.dtype).itemsize
    need = 4 * blk_bytes + (2 << 20)          # double-buffered in + out blocks + headroom
    params = dict(dimension_semantics=("parallel",))
    if need > (32 << 20):
        params["vmem_limit_bytes"] = int(need)

    out_t = pl.pallas_call(
        planar_flows_kernel,
        out_shape=jax.ShapeDtypeStruct((D, n_rows, 128), x.dtype),
        grid=grid,
        in_specs=[
            pl.BlockSpec(memory_space=pltpu.MemorySpace.SMEM),    # w      (L*D,)
            pl.BlockSpec(memory_space=pltpu.MemorySpace.SMEM),    # u_hat  (L*D,)
            pl.BlockSpec(memory_space=pltpu.MemorySpace.SMEM),    # b      (L,)
            pl.BlockSpec((D, tile_r, 128), lambda i: (0, i, 0)),  # x tile
        ],
        out_specs=pl.BlockSpec((D, tile_r, 128), lambda i: (0, i, 0)),
        compiler_params=pltpu.CompilerParams(**params),
    )(w_flat, uh_flat, b_flat, xt)

    # Free reshape, then one fused slice+transpose copy back to (N, D).
    return out_t.reshape(D, n_pad).T[:N]


def flow_structure_ref(x, w_stack, u_stack, b_stack):
    """Pure-JAX reference of the same forward pass (normflows Planar semantics)."""
    z = x.astype(jnp.float32)
    for l in range(L):
        w = w_stack[l:l + 1, :].astype(jnp.float32)
        u = u_stack[l:l + 1, :].astype(jnp.float32)
        b = b_stack[l:l + 1, :].astype(jnp.float32)
        inner = jnp.sum(w * u)
        u_hat = u + (jax.nn.softplus(inner) - 1.0 - inner) * w / jnp.sum(w * w)
        lin = jnp.sum(z * w, axis=-1, keepdims=True) + b
        z = z + u_hat * jnp.tanh(lin)
    return z.astype(x.dtype)


def init_params(key):
    """Init in the spirit of normflows Planar: u~U(-sqrt(2),sqrt(2)),
    w~U(-sqrt(2/D),sqrt(2/D)).  b gets small random values (instead of the usual
    zero init) purely to exercise the bias path in the correctness check."""
    lim_u = np.sqrt(2.0)
    lim_w = np.sqrt(2.0 / D)
    ku, kw, kb = jax.random.split(key, 3)
    u_stack = jax.random.uniform(ku, (L, D), jnp.float32, -lim_u, lim_u)
    w_stack = jax.random.uniform(kw, (L, D), jnp.float32, -lim_w, lim_w)
    b_stack = 0.1 * jax.random.normal(kb, (L, 1), jnp.float32)
    return w_stack, u_stack, b_stack


if __name__ == "__main__":
    key = jax.random.PRNGKey(0)
    kx, kp = jax.random.split(key)
    w_stack, u_stack, b_stack = init_params(kp)

    # Cases: (N, tile_r)
    #   2048, tile 8   -> 2-tile grid, exact blocks
    #   3333, tile 16  -> N not a multiple of 128 + partial boundary block
    #   5000, default  -> default tile path (auto-shrunk to keep >= 2 grid steps)
    cases = [(2048, 8), (3333, 16), (5000, 2048)]
    for i, (N, tr) in enumerate(cases):
        xi = jax.random.normal(jax.random.fold_in(kx, i), (N, D), jnp.float32)
        out = flow_structure_forward(xi, w_stack, u_stack, b_stack, tile_r=tr)
        out = jax.block_until_ready(out)
        ref = flow_structure_ref(xi, w_stack, u_stack, b_stack)
        np.testing.assert_allclose(np.asarray(out), np.asarray(ref), rtol=1e-5, atol=1e-5)

    print("KERNEL_OK")
</pallas_src>

<mosaic_0001>
module attributes {stable_mosaic.version = 11 : i64} {
  func.func @planar_flows_kernel(%arg0: i32, %arg1: memref<9xf32, #tpu.memory_space<smem>>, %arg2: memref<9xf32, #tpu.memory_space<smem>>, %arg3: memref<3xf32, #tpu.memory_space<smem>>, %arg4: memref<3x8x128xf32, #tpu.memory_space<vmem>>, %arg5: memref<3x8x128xf32, #tpu.memory_space<vmem>>) attributes {dimension_semantics = [#tpu.dimension_semantics<parallel>], iteration_bounds = array<i64: 2>, scalar_prefetch = 0 : i64, scratch_operands = 0 : i64, tpu.core_type = #tpu.core_type<tc>, window_params = [{transform_indices = @transform_0, window_bounds = array<i64: 9>}, {transform_indices = @transform_1, window_bounds = array<i64: 9>}, {transform_indices = @transform_2, window_bounds = array<i64: 3>}, {transform_indices = @transform_3, window_bounds = array<i64: 3, 8, 128>}, {transform_indices = @transform_4, window_bounds = array<i64: 3, 8, 128>}]} {
    %c0 = arith.constant 0 : index
    %c0_0 = arith.constant 0 : index
    %c0_1 = arith.constant 0 : index
    %0 = vector.load %arg4[%c0, %c0_0, %c0_1] : memref<3x8x128xf32, #tpu.memory_space<vmem>>, vector<1x8x128xf32>
    %1 = vector.shape_cast %0 : vector<1x8x128xf32> to vector<8x128xf32>
    %c1 = arith.constant 1 : index
    %c0_2 = arith.constant 0 : index
    %c0_3 = arith.constant 0 : index
    %2 = vector.load %arg4[%c1, %c0_2, %c0_3] : memref<3x8x128xf32, #tpu.memory_space<vmem>>, vector<1x8x128xf32>
    %3 = vector.shape_cast %2 : vector<1x8x128xf32> to vector<8x128xf32>
    %c2 = arith.constant 2 : index
    %c0_4 = arith.constant 0 : index
    %c0_5 = arith.constant 0 : index
    %4 = vector.load %arg4[%c2, %c0_4, %c0_5] : memref<3x8x128xf32, #tpu.memory_space<vmem>>, vector<1x8x128xf32>
    %5 = vector.shape_cast %4 : vector<1x8x128xf32> to vector<8x128xf32>
    %c0_6 = arith.constant 0 : index
    %6 = memref.load %arg1[%c0_6] : memref<9xf32, #tpu.memory_space<smem>>
    %c1_7 = arith.constant 1 : index
    %7 = memref.load %arg1[%c1_7] : memref<9xf32, #tpu.memory_space<smem>>
    %c2_8 = arith.constant 2 : index
    %8 = memref.load %arg1[%c2_8] : memref<9xf32, #tpu.memory_space<smem>>
    %c0_9 = arith.constant 0 : index
    %9 = memref.load %arg2[%c0_9] : memref<9xf32, #tpu.memory_space<smem>>
    %c1_10 = arith.constant 1 : index
    %10 = memref.load %arg2[%c1_10] : memref<9xf32, #tpu.memory_space<smem>>
    %c2_11 = arith.constant 2 : index
    %11 = memref.load %arg2[%c2_11] : memref<9xf32, #tpu.memory_space<smem>>
    %c0_12 = arith.constant 0 : index
    %12 = memref.load %arg3[%c0_12] : memref<3xf32, #tpu.memory_space<smem>>
    %13 = vector.broadcast %6 : f32 to vector<8x128xf32>
    %14 = arith.mulf %13, %1 : vector<8x128xf32>
    %15 = vector.broadcast %7 : f32 to vector<8x128xf32>
    %16 = arith.mulf %15, %3 : vector<8x128xf32>
    %17 = arith.addf %14, %16 : vector<8x128xf32>
    %18 = vector.broadcast %8 : f32 to vector<8x128xf32>
    %19 = arith.mulf %18, %5 : vector<8x128xf32>
    %20 = arith.addf %17, %19 : vector<8x128xf32>
    %21 = vector.broadcast %12 : f32 to vector<8x128xf32>
    %22 = arith.addf %20, %21 : vector<8x128xf32>
    %23 = math.tanh %22 : vector<8x128xf32>
    %24 = vector.broadcast %9 : f32 to vector<8x128xf32>
    %25 = arith.mulf %24, %23 : vector<8x128xf32>
    %26 = arith.addf %1, %25 : vector<8x128xf32>
    %27 = vector.broadcast %10 : f32 to vector<8x128xf32>
    %28 = arith.mulf %27, %23 : vector<8x128xf32>
    %29 = arith.addf %3, %28 : vector<8x128xf32>
    %30 = vector.broadcast %11 : f32 to vector<8x128xf32>
    %31 = arith.mulf %30, %23 : vector<8x128xf32>
    %32 = arith.addf %5, %31 : vector<8x128xf32>
    %c3 = arith.constant 3 : index
    %33 = memref.load %arg1[%c3] : memref<9xf32, #tpu.memory_space<smem>>
    %c4 = arith.constant 4 : index
    %34 = memref.load %arg1[%c4] : memref<9xf32, #tpu.memory_space<smem>>
    %c5 = arith.constant 5 : index
    %35 = memref.load %arg1[%c5] : memref<9xf32, #tpu.memory_space<smem>>
    %c3_13 = arith.constant 3 : index
    %36 = memref.load %arg2[%c3_13] : memref<9xf32, #tpu.memory_space<smem>>
    %c4_14 = arith.constant 4 : index
    %37 = memref.load %arg2[%c4_14] : memref<9xf32, #tpu.memory_space<smem>>
    %c5_15 = arith.constant 5 : index
    %38 = memref.load %arg2[%c5_15] : memref<9xf32, #tpu.memory_space<smem>>
    %c1_16 = arith.constant 1 : index
    %39 = memref.load %arg3[%c1_16] : memref<3xf32, #tpu.memory_space<smem>>
    %40 = vector.broadcast %33 : f32 to vector<8x128xf32>
    %41 = arith.mulf %40, %26 : vector<8x128xf32>
    %42 = vector.broadcast %34 : f32 to vector<8x128xf32>
    %43 = arith.mulf %42, %29 : vector<8x128xf32>
    %44 = arith.addf %41, %43 : vector<8x128xf32>
    %45 = vector.broadcast %35 : f32 to vector<8x128xf32>
    %46 = arith.mulf %45, %32 : vector<8x128xf32>
    %47 = arith.addf %44, %46 : vector<8x128xf32>
    %48 = vector.broadcast %39 : f32 to vector<8x128xf32>
    %49 = arith.addf %47, %48 : vector<8x128xf32>
    %50 = math.tanh %49 : vector<8x128xf32>
    %51 = vector.broadcast %36 : f32 to vector<8x128xf32>
    %52 = arith.mulf %51, %50 : vector<8x128xf32>
    %53 = arith.addf %26, %52 : vector<8x128xf32>
    %54 = vector.broadcast %37 : f32 to vector<8x128xf32>
    %55 = arith.mulf %54, %50 : vector<8x128xf32>
    %56 = arith.addf %29, %55 : vector<8x128xf32>
    %57 = vector.broadcast %38 : f32 to vector<8x128xf32>
    %58 = arith.mulf %57, %50 : vector<8x128xf32>
    %59 = arith.addf %32, %58 : vector<8x128xf32>
    %c6 = arith.constant 6 : index
    %60 = memref.load %arg1[%c6] : memref<9xf32, #tpu.memory_space<smem>>
    %c7 = arith.constant 7 : index
    %61 = memref.load %arg1[%c7] : memref<9xf32, #tpu.memory_space<smem>>
    %c8 = arith.constant 8 : index
    %62 = memref.load %arg1[%c8] : memref<9xf32, #tpu.memory_space<smem>>
    %c6_17 = arith.constant 6 : index
    %63 = memref.load %arg2[%c6_17] : memref<9xf32, #tpu.memory_space<smem>>
    %c7_18 = arith.constant 7 : index
    %64 = memref.load %arg2[%c7_18] : memref<9xf32, #tpu.memory_space<smem>>
    %c8_19 = arith.constant 8 : index
    %65 = memref.load %arg2[%c8_19] : memref<9xf32, #tpu.memory_space<smem>>
    %c2_20 = arith.constant 2 : index
    %66 = memref.load %arg3[%c2_20] : memref<3xf32, #tpu.memory_space<smem>>
    %67 = vector.broadcast %60 : f32 to vector<8x128xf32>
    %68 = arith.mulf %67, %53 : vector<8x128xf32>
    %69 = vector.broadcast %61 : f32 to vector<8x128xf32>
    %70 = arith.mulf %69, %56 : vector<8x128xf32>
    %71 = arith.addf %68, %70 : vector<8x128xf32>
    %72 = vector.broadcast %62 : f32 to vector<8x128xf32>
    %73 = arith.mulf %72, %59 : vector<8x128xf32>
    %74 = arith.addf %71, %73 : vector<8x128xf32>
    %75 = vector.broadcast %66 : f32 to vector<8x128xf32>
    %76 = arith.addf %74, %75 : vector<8x128xf32>
    %77 = math.tanh %76 : vector<8x128xf32>
    %78 = vector.broadcast %63 : f32 to vector<8x128xf32>
    %79 = arith.mulf %78, %77 : vector<8x128xf32>
    %80 = arith.addf %53, %79 : vector<8x128xf32>
    %81 = vector.broadcast %64 : f32 to vector<8x128xf32>
    %82 = arith.mulf %81, %77 : vector<8x128xf32>
    %83 = arith.addf %56, %82 : vector<8x128xf32>
    %84 = vector.broadcast %65 : f32 to vector<8x128xf32>
    %85 = arith.mulf %84, %77 : vector<8x128xf32>
    %86 = arith.addf %59, %85 : vector<8x128xf32>
    %c0_21 = arith.constant 0 : index
    %c0_22 = arith.constant 0 : index
    %c0_23 = arith.constant 0 : index
    %87 = vector.load %arg5[%c0_21, %c0_22, %c0_23] : memref<3x8x128xf32, #tpu.memory_space<vmem>>, vector<1x8x128xf32>
    %88 = vector.shape_cast %87 : vector<1x8x128xf32> to vector<8x128xf32>
    %89 = vector.shape_cast %80 : vector<8x128xf32> to vector<1x8x128xf32>
    tpu.vector_store %arg5[%c0_21, %c0_22, %c0_23], %89 {strides = array<i32>} : memref<3x8x128xf32, #tpu.memory_space<vmem>>, vector<1x8x128xf32>,
    %c1_24 = arith.constant 1 : index
    %c0_25 = arith.constant 0 : index
    %c0_26 = arith.constant 0 : index
    %90 = vector.load %arg5[%c1_24, %c0_25, %c0_26] : memref<3x8x128xf32, #tpu.memory_space<vmem>>, vector<1x8x128xf32>
    %91 = vector.shape_cast %90 : vector<1x8x128xf32> to vector<8x128xf32>
    %92 = vector.shape_cast %83 : vector<8x128xf32> to vector<1x8x128xf32>
    tpu.vector_store %arg5[%c1_24, %c0_25, %c0_26], %92 {strides = array<i32>} : memref<3x8x128xf32, #tpu.memory_space<vmem>>, vector<1x8x128xf32>,
    %c2_27 = arith.constant 2 : index
    %c0_28 = arith.constant 0 : index
    %c0_29 = arith.constant 0 : index
    %93 = vector.load %arg5[%c2_27, %c0_28, %c0_29] : memref<3x8x128xf32, #tpu.memory_space<vmem>>, vector<1x8x128xf32>
    %94 = vector.shape_cast %93 : vector<1x8x128xf32> to vector<8x128xf32>
    %95 = vector.shape_cast %86 : vector<8x128xf32> to vector<1x8x128xf32>
    tpu.vector_store %arg5[%c2_27, %c0_28, %c0_29], %95 {strides = array<i32>} : memref<3x8x128xf32, #tpu.memory_space<vmem>>, vector<1x8x128xf32>,
    return
  }
  func.func @transform_0(%arg0: i32) -> i32 {
    %c0_i32 = arith.constant 0 : i32
    %c0_i32_0 = arith.constant 0 : i32
    return %c0_i32 : i32
  }
  func.func @transform_1(%arg0: i32) -> i32 {
    %c0_i32 = arith.constant 0 : i32
    %c0_i32_0 = arith.constant 0 : i32
    return %c0_i32 : i32
  }
  func.func @transform_2(%arg0: i32) -> i32 {
    %c0_i32 = arith.constant 0 : i32
    %c0_i32_0 = arith.constant 0 : i32
    return %c0_i32 : i32
  }
  func.func @transform_3(%arg0: i32) -> (i32, i32, i32) {
    %c0_i32 = arith.constant 0 : i32
    %c0_i32_0 = arith.constant 0 : i32
    %c0_i32_1 = arith.constant 0 : i32
    return %c0_i32, %arg0, %c0_i32_0 : i32, i32, i32
  }
  func.func @transform_4(%arg0: i32) -> (i32, i32, i32) {
    %c0_i32 = arith.constant 0 : i32
    %c0_i32_0 = arith.constant 0 : i32
    %c0_i32_1 = arith.constant 0 : i32
    return %c0_i32, %arg0, %c0_i32_0 : i32, i32, i32
  }
}

</mosaic_0001>

<llo_original>
// kernel: tpu_custom_call.1
$region0: #{tpu_custom_call.1}
  #allocation0 [shape = 'u32[]', space=smem, size = 0x4, offset = 0x4, fixed_abs, tag = 'smem constant byte address 0x4 - core index']
  #allocation1 [shape = 'u32[72,128]{1,0:T(1,128)}', space=vmem, size = 0x9000, scoped, tag = 'internal scratch']
  %s0 = inlined_call_operand.hbm [shape: f32[9], index: 0, kind: input, shape index: {}]
  %s1 = inlined_call_operand.hbm [shape: f32[9], index: 1, kind: input, shape index: {}]
  %s2 = inlined_call_operand.vmem [shape: f32[3], index: 2, kind: input, shape index: {}]
  %s3 = inlined_call_operand.hbm [shape: f32[3,16,128], index: 3, kind: input, shape index: {}]
  %s4 = inlined_call_operand.hbm [shape: f32[3,16,128], index: 4, kind: output, shape index: {}]
  %s5 = sld [smem:[#allocation0]]
  $region65: #{tpu_custom_call.1} parent=0
    _
  %s7 = ssub.s32 1, %s5
  %s8 = scalar_select 0, %s7, %s5
  $region1: #{tpu_custom_call.1} parent=0
    #allocation2 [shape = 'u8[512]{0}', space=smem, size = 0x200, scoped, tag = 'input window, operand 0, single buffered']
    #allocation3 [shape = 's32[2]{0}', space=sflag, size = 0x8, scoped, tag = 'scoped memory for tpu_custom_call.1']
    #allocation4 [shape = 's32[2]{0}', space=sflag, size = 0x8, scoped, tag = 'scoped memory for tpu_custom_call.1']
    #allocation5 [shape = 's32[2]{0}', space=sflag, size = 0x8, scoped, tag = 'scoped memory for tpu_custom_call.1']
    #allocation6 [shape = 's32[2]{0}', space=sflag, size = 0x8, scoped, tag = 'scoped memory for tpu_custom_call.1']
    #allocation7 [shape = 'u8[512]{0}', space=smem, size = 0x200, scoped, tag = 'input window, operand 1, single buffered']
    #allocation8 [shape = 's32[1]{0}', space=sflag, size = 0x4, scoped, tag = 'scoped memory for tpu_custom_call.1']
    #allocation9 [shape = 'u8[512]{0}', space=smem, size = 0x200, scoped, tag = 'input window, operand 2, single buffered']
    #allocation10 [shape = 'u8[24576]{0}', space=vmem, size = 0x6000, scoped, tag = 'input window, operand 3']
    #allocation11 [shape = 'u8[24576]{0}', space=vmem, size = 0x6000, scoped, tag = 'output window, operand 0']
    %9 = vsyncpa [#allocation5], 0
    %10 = vsyncpa [#allocation8], 0
    %11 = vsyncpa [#allocation6], 0
    %12 = vsyncpa [#allocation3], 0
    %s13 = scalar_lea.sflag [#allocation3], 1
    %14 = vsyncpa %s13, 0
    %15 = vsyncpa [#allocation4], 0
    %s16 = scalar_lea.sflag [#allocation4], 1
    %17 = vsyncpa %s16, 0
    loop: start=0, step=1, limit=4
    $region2: #{tpu_custom_call.1} parent=1 // loop_pre_header
      _
    $region3: #{tpu_custom_call.1} parent=1 // loop_header
      %s19 = sphi 0, %s23
      %p20 = scmp.ge.s32.totalorder %s19, 4
      %s27 = sphi 0, %s27
      %s29 = sphi 0, %s27
      %s30 = sphi 0, %s29
      %s44 = sphi 0, %s30
      %s48 = sphi 0, %s48
      %s50 = sphi 0, %s48
      %s51 = sphi 0, %s50
      %s65 = sphi 0, %s51
      %s69 = sphi 0, %s69
      %s71 = sphi 0, %s69
      %s72 = sphi 0, %s71
      %s86 = sphi 0, %s72
      %s92 = sphi 0, %s94
      %s95 = sphi 0, %s92
      %s96 = sphi 0, %s95
      %s112 = sphi 0, %s96
      %s118 = sphi 0, %s120
      %s121 = sphi 0, %s118
      %s122 = sphi 0, %s121
      %s138 = sphi 0, %s122
    $region4: #{tpu_custom_call.1} parent=1 // loop_header_branch
      %22 = sbr.rel (%p20) target = $region8
    $region5: #{tpu_custom_call.1} parent=1 // loop_body
      %s24 = ssub.s32 %s19, 1
      %s25 = ssub.s32 %s19, 2
      %s26 = sadd.s32 %s19, 1
      %s28 = sadd.s32 %s27, 1
      %p31 = scmp.eq.s32.totalorder %s19, 1
      %p32 = scmp.ne.s32.totalorder %s27, %s29
      %p33 = scmp.eq.s32.totalorder %s19, 0
      %p34 = por %p32, %p33
      %p35 = scmp.ne.s32.totalorder %s27, %s29
      %p36 = scmp.eq.s32.totalorder %s24, 1
      %p37 = por %p35, %p36
      %p38 = scmp.ne.s32.totalorder %s29, %s30
      %p39 = scmp.eq.s32.totalorder %s24, 0
      %p40 = por %p38, %p39
      %p41 = scmp.ne.s32.totalorder %s29, %s30
      %p42 = scmp.eq.s32.totalorder %s25, 1
      %p43 = por %p41, %p42
      %p45 = scmp.ne.s32.totalorder %s30, %s44
      %p46 = scmp.eq.s32.totalorder %s25, 0
      %p47 = por %p45, %p46
      %s49 = sadd.s32 %s48, 1
      %p52 = scmp.eq.s32.totalorder %s19, 1
      %p53 = scmp.ne.s32.totalorder %s48, %s50
      %p54 = scmp.eq.s32.totalorder %s19, 0
      %p55 = por %p53, %p54
      %p56 = scmp.ne.s32.totalorder %s48, %s50
      %p57 = scmp.eq.s32.totalorder %s24, 1
      %p58 = por %p56, %p57
      %p59 = scmp.ne.s32.totalorder %s50, %s51
      %p60 = scmp.eq.s32.totalorder %s24, 0
      %p61 = por %p59, %p60
      %p62 = scmp.ne.s32.totalorder %s50, %s51
      %p63 = scmp.eq.s32.totalorder %s25, 1
      %p64 = por %p62, %p63
      %p66 = scmp.ne.s32.totalorder %s51, %s65
      %p67 = scmp.eq.s32.totalorder %s25, 0
      %p68 = por %p66, %p67
      %s70 = sadd.s32 %s69, 1
      %p73 = scmp.eq.s32.totalorder %s19, 1
      %p74 = scmp.ne.s32.totalorder %s69, %s71
      %p75 = scmp.eq.s32.totalorder %s19, 0
      %p76 = por %p74, %p75
      %p77 = scmp.ne.s32.totalorder %s69, %s71
      %p78 = scmp.eq.s32.totalorder %s24, 1
      %p79 = por %p77, %p78
      %p80 = scmp.ne.s32.totalorder %s71, %s72
      %p81 = scmp.eq.s32.totalorder %s24, 0
      %p82 = por %p80, %p81
      %p83 = scmp.ne.s32.totalorder %s71, %s72
      %p84 = scmp.eq.s32.totalorder %s25, 1
      %p85 = por %p83, %p84
      %p87 = scmp.ne.s32.totalorder %s72, %s86
      %p88 = scmp.eq.s32.totalorder %s25, 0
      %p89 = por %p87, %p88
      %s90 = ssub.s32 %s19, %s26
      %p91 = scmp.eq.s32.totalorder %s90, 0
      %s93 = sadd.s32 %s92, 1
      %s94 = scalar_select %p91, %s92, %s93
      %p97 = pneg %p91
      %p98 = scmp.eq.s32.totalorder %s19, 1
      %p99 = por %p97, %p98
      %p100 = scmp.ne.s32.totalorder %s92, %s95
      %p101 = scmp.eq.s32.totalorder %s19, 0
      %p102 = por %p100, %p101
      %p103 = scmp.ne.s32.totalorder %s92, %s95
      %p104 = scmp.eq.s32.totalorder %s24, 1
      %p105 = por %p103, %p104
      %p106 = scmp.ne.s32.totalorder %s95, %s96
      %p107 = scmp.eq.s32.totalorder %s24, 0
      %p108 = por %p106, %p107
      %p109 = scmp.ne.s32.totalorder %s95, %s96
      %p110 = scmp.eq.s32.totalorder %s25, 1
      %p111 = por %p109, %p110
      %p113 = scmp.ne.s32.totalorder %s96, %s112
      %p114 = scmp.eq.s32.totalorder %s25, 0
      %p115 = por %p113, %p114
      %s116 = ssub.s32 %s19, %s26
      %p117 = scmp.eq.s32.totalorder %s116, 0
      %s119 = sadd.s32 %s118, 1
      %s120 = scalar_select %p117, %s118, %s119
      %p123 = pneg %p117
      %p124 = scmp.eq.s32.totalorder %s19, 1
      %p125 = por %p123, %p124
      %p126 = scmp.ne.s32.totalorder %s118, %s121
      %p127 = scmp.eq.s32.totalorder %s19, 0
      %p128 = por %p126, %p127
      %p129 = scmp.ne.s32.totalorder %s118, %s121
      %p130 = scmp.eq.s32.totalorder %s24, 1
      %p131 = por %p129, %p130
      %p132 = scmp.ne.s32.totalorder %s121, %s122
      %p133 = scmp.eq.s32.totalorder %s24, 0
      %p134 = por %p132, %p133
      %p135 = scmp.ne.s32.totalorder %s121, %s122
      %p136 = scmp.eq.s32.totalorder %s25, 1
      %p137 = por %p135, %p136
      %p139 = scmp.ne.s32.totalorder %s122, %s138
      %p140 = scmp.eq.s32.totalorder %s25, 0
      %p141 = por %p139, %p140
      %p142 = scmp.le.s32.totalorder 1, %s19
      %p143 = scmp.lt.s32.totalorder %s19, 3
      %p144 = pnand %p142, %p143
      %p145 = pneg %p144
      // Predicated region
      $region9: #{tpu_custom_call.1} parent=5 // pred_check
        _
      $region10: #{tpu_custom_call.1} parent=5 // pred_check_branch
        %147 = sbr.rel (%p144) target = $region12
      $region11: #{tpu_custom_call.1} parent=5 // pred_region
        %s148 = ssub.s32 %s19, 1
        // Predicated region
        $region13: #{tpu_custom_call.1} parent=11 // pred_check
          %p149 = pneg %p40
        $region14: #{tpu_custom_call.1} parent=11 // pred_check_branch
          %151 = sbr.rel (%p149) target = $region16
        $region15: #{tpu_custom_call.1} parent=11 // pred_region
          %153 = vsyncadd [#allocation5], 0
          %s155 = sshll.u32 %s0, 4
          %s156 = int_to_ptr.hbm [resolvable:$true] %s155
          %158 = dma.hbm_to_smem %s156, 16, [#allocation2], [#allocation5]
        $region16: #{tpu_custom_call.1} parent=11 // pred_fallthru
          _
        // Predicated region
        $region17: #{tpu_custom_call.1} parent=11 // pred_check
          %p159 = pneg %p61
        $region18: #{tpu_custom_call.1} parent=11 // pred_check_branch
          %161 = sbr.rel (%p159) target = $region20
        $region19: #{tpu_custom_call.1} parent=11 // pred_region
          %163 = vsyncadd [#allocation8], 0
          %s165 = sshll.u32 %s1, 4
          %s166 = int_to_ptr.hbm [resolvable:$true] %s165
          %168 = dma.hbm_to_smem %s166, 16, [#allocation7], [#allocation8]
        $region20: #{tpu_custom_call.1} parent=11 // pred_fallthru
          _
        // Predicated region
        $region21: #{tpu_custom_call.1} parent=11 // pred_check
          %p169 = pneg %p82
        $region22: #{tpu_custom_call.1} parent=11 // pred_check_branch
          %171 = sbr.rel (%p169) target = $region24
        $region23: #{tpu_custom_call.1} parent=11 // pred_region
          %173 = vsyncadd [#allocation6], 0
          %s175 = sshll.u32 %s2, 4
          %s176 = int_to_ptr.vmem [resolvable:$true] %s175
          %178 = dma.vmem_to_smem %s176, 16, [#allocation9], [#allocation6]
        $region24: #{tpu_custom_call.1} parent=11 // pred_fallthru
          _
      $region12: #{tpu_custom_call.1} parent=5 // pred_fallthru
        _
      %p179 = scmp.lt.s32.totalorder %s19, 2
      // Predicated region
      $region25: #{tpu_custom_call.1} parent=5 // pred_check
        %p180 = pneg %p179
      $region26: #{tpu_custom_call.1} parent=5 // pred_check_branch
        %182 = sbr.rel (%p180) target = $region28
      $region27: #{tpu_custom_call.1} parent=5 // pred_region
        // Predicated region
        $region29: #{tpu_custom_call.1} parent=27 // pred_check
          %p183 = pneg %p102
        $region30: #{tpu_custom_call.1} parent=27 // pred_check_branch
          %185 = sbr.rel (%p183) target = $region32
        $region31: #{tpu_custom_call.1} parent=27 // pred_region
          %s186 = sand.u32 %s92, 1
          %s187 = scalar_lea.sflag [#allocation3], %s186
          %s188 = sand.u32 %s92, 1
          %s189 = smul.addr %s188, 24
          %s190 = scalar_lea.vmem [#allocation10], %s189
          %192 = vsyncadd %s187, 0
          %s193 = smul.addr %s19, 8
          %s194 = scalar_lea.hbm %s3, %s193
          %s195 = sshll.u32 %s194, 4
          %s196 = int_to_ptr.hbm [resolvable:$true] %s195
          %s197 = sshll.u32 %s190, 4
          %s198 = int_to_ptr.vmem [resolvable:$true] %s197
          %203 = dma.hbm_to_vmem [thread:$0]  %s196, 384, %s198, %s187, 256, 128, 8
        $region32: #{tpu_custom_call.1} parent=27 // pred_fallthru
          _
      $region28: #{tpu_custom_call.1} parent=5 // pred_fallthru
        _
      %p204 = scmp.le.s32.totalorder 1, %s19
      %p205 = scmp.lt.s32.totalorder %s19, 3
      %p206 = pnand %p204, %p205
      %p207 = pneg %p206
      // Predicated region
      $region33: #{tpu_custom_call.1} parent=5 // pred_check
        _
      $region34: #{tpu_custom_call.1} parent=5 // pred_check_branch
        %209 = sbr.rel (%p206) target = $region36
      $region35: #{tpu_custom_call.1} parent=5 // pred_region
        %s210 = ssub.s32 %s19, 1
        // Predicated region
        $region37: #{tpu_custom_call.1} parent=35 // pred_check
          %p211 = pneg %p40
        $region38: #{tpu_custom_call.1} parent=35 // pred_check_branch
          %213 = sbr.rel (%p211) target = $region40
        $region39: #{tpu_custom_call.1} parent=35 // pred_region
          %215 = dma.done [#allocation5], 16
        $region40: #{tpu_custom_call.1} parent=35 // pred_fallthru
          _
        // Predicated region
        $region41: #{tpu_custom_call.1} parent=35 // pred_check
          %p216 = pneg %p61
        $region42: #{tpu_custom_call.1} parent=35 // pred_check_branch
          %218 = sbr.rel (%p216) target = $region44
        $region43: #{tpu_custom_call.1} parent=35 // pred_region
          %220 = dma.done [#allocation8], 16
        $region44: #{tpu_custom_call.1} parent=35 // pred_fallthru
          _
        // Predicated region
        $region45: #{tpu_custom_call.1} parent=35 // pred_check
          %p221 = pneg %p82
        $region46: #{tpu_custom_call.1} parent=35 // pred_check_branch
          %223 = sbr.rel (%p221) target = $region48
        $region47: #{tpu_custom_call.1} parent=35 // pred_region
          %225 = dma.done [#allocation6], 16
        $region48: #{tpu_custom_call.1} parent=35 // pred_fallthru
          _
        %s226 = sand.u32 %s95, 1
        %s227 = scalar_lea.sflag [#allocation3], %s226
        %s228 = sand.u32 %s95, 1
        %s229 = smul.addr %s228, 24
        %s230 = scalar_lea.vmem [#allocation10], %s229
        // Predicated region
        $region49: #{tpu_custom_call.1} parent=35 // pred_check
          %p231 = pneg %p108
        $region50: #{tpu_custom_call.1} parent=35 // pred_check_branch
          %233 = sbr.rel (%p231) target = $region52
        $region51: #{tpu_custom_call.1} parent=35 // pred_region
          %235 = dma.done %s227, 384
        $region52: #{tpu_custom_call.1} parent=35 // pred_fallthru
          _
        %236 = sfence
        %p237 = pneg %p40
        %p238 = pneg %p37
        %p239 = pneg %p61
        %p240 = pneg %p58
        %p241 = pneg %p82
        %p242 = pneg %p79
        %s243 = sand.u32 %s95, 1
        %s244 = scalar_lea.sflag [#allocation3], %s243
        %s245 = sand.u32 %s95, 1
        %s246 = smul.addr %s245, 24
        %s247 = scalar_lea.vmem [#allocation10], %s246
        %p248 = pneg %p108
        %p249 = pneg %p105
        %p250 = pneg %p134
        %p251 = pneg %p131
        %s252 = sand.u32 %s121, 1
        %s253 = scalar_lea.sflag [#allocation4], %s252
        %s254 = sand.u32 %s121, 1
        %s255 = smul.addr %s254, 24
        %s256 = scalar_lea.vmem [#allocation11], %s255
        %v257 = vld [vmem:[%s230] sm:$0xff]
        %s258 = scalar_lea.vmem %s230, 8 [#allocation10]
        %v259 = vld [vmem:[%s258] sm:$0xff]
        %s260 = scalar_lea.vmem %s230, 16 [#allocation10]
        %v261 = vld [vmem:[%s260] sm:$0xff]
        %s262 = sld [smem:[#allocation2]]
        %s263 = sld [smem:[#allocation2 + $0x1]]
        %s264 = sld [smem:[#allocation2 + $0x2]]
        %s265 = sld [smem:[#allocation7]]
        %s266 = sld [smem:[#allocation7 + $0x1]]
        %s267 = sld [smem:[#allocation7 + $0x2]]
        %s268 = sld [smem:[#allocation9]]
        %v269 = vstv %s262
        %v270 = vmul.f32 %v269, %v257
        %v271 = vstv %s263
        %v272 = vmul.f32 %v271, %v259
        %v273 = vadd.f32 %v270, %v272
        %v274 = vstv %s264
        %v275 = vmul.f32 %v274, %v261
        %v276 = vadd.f32 %v273, %v275
        %v277 = vstv %s268
        %v278 = vadd.f32 %v276, %v277
        %v279 = vtanh.pop %v278
        %v280 = vstv %s265
        %v281 = vmul.f32 %v280, %v279
        %v282 = vadd.f32 %v257, %v281
        %v283 = vstv %s266
        %v284 = vmul.f32 %v283, %v279
        %v285 = vadd.f32 %v259, %v284
        %v286 = vstv %s267
        %v287 = vmul.f32 %v286, %v279
        %v288 = vadd.f32 %v261, %v287
        %s289 = sld [smem:[#allocation2 + $0x3]]
        %s290 = sld [smem:[#allocation2 + $0x4]]
        %s291 = sld [smem:[#allocation2 + $0x5]]
        %s292 = sld [smem:[#allocation7 + $0x3]]
        %s293 = sld [smem:[#allocation7 + $0x4]]
        %s294 = sld [smem:[#allocation7 + $0x5]]
        %s295 = sld [smem:[#allocation9 + $0x1]]
        %v296 = vstv %s289
        %v297 = vmul.f32 %v296, %v282
        %v298 = vstv %s290
        %v299 = vmul.f32 %v298, %v285
        %v300 = vadd.f32 %v297, %v299
        %v301 = vstv %s291
        %v302 = vmul.f32 %v301, %v288
        %v303 = vadd.f32 %v300, %v302
        %v304 = vstv %s295
        %v305 = vadd.f32 %v303, %v304
        %v306 = vtanh.pop %v305
        %v307 = vstv %s292
        %v308 = vmul.f32 %v307, %v306
        %v309 = vadd.f32 %v282, %v308
        %v310 = vstv %s293
        %v311 = vmul.f32 %v310, %v306
        %v312 = vadd.f32 %v285, %v311
        %v313 = vstv %s294
        %v314 = vmul.f32 %v313, %v306
        %v315 = vadd.f32 %v288, %v314
        %s316 = sld [smem:[#allocation2 + $0x6]]
        %s317 = sld [smem:[#allocation2 + $0x7]]
        %s318 = sld [smem:[#allocation2 + $0x8]]
        %s319 = sld [smem:[#allocation7 + $0x6]]
        %s320 = sld [smem:[#allocation7 + $0x7]]
        %s321 = sld [smem:[#allocation7 + $0x8]]
        %s322 = sld [smem:[#allocation9 + $0x2]]
        %v323 = vstv %s316
        %v324 = vmul.f32 %v323, %v309
        %v325 = vstv %s317
        %v326 = vmul.f32 %v325, %v312
        %v327 = vadd.f32 %v324, %v326
        %v328 = vstv %s318
        %v329 = vmul.f32 %v328, %v315
        %v330 = vadd.f32 %v327, %v329
        %v331 = vstv %s322
        %v332 = vadd.f32 %v330, %v331
        %v333 = vtanh.pop %v332
        %v334 = vstv %s319
        %v335 = vmul.f32 %v334, %v333
        %v336 = vadd.f32 %v309, %v335
        %v337 = vstv %s320
        %v338 = vmul.f32 %v337, %v333
        %v339 = vadd.f32 %v312, %v338
        %v340 = vstv %s321
        %v341 = vmul.f32 %v340, %v333
        %v342 = vadd.f32 %v315, %v341
        %343 = vst [vmem:[%s256] sm:$0xff] %v336
        %s344 = scalar_lea.vmem %s256, 8 [#allocation11]
        %345 = vst [vmem:[%s344] sm:$0xff] %v339
        %s346 = scalar_lea.vmem %s256, 16 [#allocation11]
        %347 = vst [vmem:[%s346] sm:$0xff] %v342
        %s348 = sand.u32 %s121, 1
        %s349 = scalar_lea.sflag [#allocation4], %s348
        %s350 = sand.u32 %s121, 1
        %s351 = smul.addr %s350, 24
        %s352 = scalar_lea.vmem [#allocation11], %s351
        // Predicated region
        $region53: #{tpu_custom_call.1} parent=35 // pred_check
          %p353 = pneg %p131
        $region54: #{tpu_custom_call.1} parent=35 // pred_check_branch
          %355 = sbr.rel (%p353) target = $region56
        $region55: #{tpu_custom_call.1} parent=35 // pred_region
          %357 = vsyncadd %s349, 0
          %s358 = smul.addr %s24, 8
          %s359 = scalar_lea.hbm %s4, %s358
          %s360 = sshll.u32 %s352, 4
          %s361 = int_to_ptr.vmem [resolvable:$true] %s360
          %s362 = sshll.u32 %s359, 4
          %s363 = int_to_ptr.hbm [resolvable:$true] %s362
          %368 = dma.vmem_to_hbm [thread:$0]  %s361, 384, %s363, %s349, 128, 256, 8
        $region56: #{tpu_custom_call.1} parent=35 // pred_fallthru
          _
      $region36: #{tpu_custom_call.1} parent=5 // pred_fallthru
        _
      %p369 = scmp.le.s32.totalorder 2, %s19
      // Predicated region
      $region57: #{tpu_custom_call.1} parent=5 // pred_check
        %p370 = pneg %p369
      $region58: #{tpu_custom_call.1} parent=5 // pred_check_branch
        %372 = sbr.rel (%p370) target = $region60
      $region59: #{tpu_custom_call.1} parent=5 // pred_region
        %s373 = ssub.s32 %s19, 2
        // Predicated region
        $region61: #{tpu_custom_call.1} parent=59 // pred_check
          %p374 = pneg %p137
        $region62: #{tpu_custom_call.1} parent=59 // pred_check_branch
          %376 = sbr.rel (%p374) target = $region64
        $region63: #{tpu_custom_call.1} parent=59 // pred_region
          %s377 = sand.u32 %s122, 1
          %s378 = scalar_lea.sflag [#allocation4], %s377
          %s379 = sand.u32 %s122, 1
          %s380 = smul.addr %s379, 24
          %s381 = scalar_lea.vmem [#allocation11], %s380
          %383 = dma.done %s378, 384
        $region64: #{tpu_custom_call.1} parent=59 // pred_fallthru
          _
      $region60: #{tpu_custom_call.1} parent=5 // pred_fallthru
        _
    $region6: #{tpu_custom_call.1} parent=1 // loop_footer
      %s23 = sadd.s32 1, %s19
    $region7: #{tpu_custom_call.1} parent=1 // loop_footer_branch
      %18 = sbr.rel target = $region3
    $region8: #{tpu_custom_call.1} parent=1 // loop_exit
      _
    %384 = vsyncpa [#allocation3], 1
    %s385 = scalar_lea.sflag [#allocation3], 1
    %386 = vsyncpa %s385, 1
    %387 = vsyncpa [#allocation4], 1
    %s388 = scalar_lea.sflag [#allocation4], 1
    %389 = vsyncpa %s388, 1
    %390 = vsyncpa [#allocation5], 1
    %s391 = scalar_lea.sflag [#allocation5], 1
    %392 = vsyncpa %s391, 1
    %393 = vsyncpa [#allocation8], 1
    %394 = vsyncpa [#allocation6], 1
    %s395 = scalar_lea.sflag [#allocation6], 1
    %396 = vsyncpa %s395, 1

</llo_original>
